<compile_context>
chip_gen: v7x
topology: tpu7x:2x2x1
jax: 0.10.0
libtpu: 0.0.40
codegen_flags: <defaults>
</compile_context>

<pallas_src>
import functools

import jax
import jax.numpy as jnp
from jax.experimental import pallas as pl
from jax.experimental.pallas import tpu as pltpu


def _round_up(n: int, m: int) -> int:
    return ((n + m - 1) // m) * m


def _mlp_kernel(x_ref, w1_ref, b1_ref, w2_ref, b2_ref, o_ref, *, out_dim: int):
    # fc1 + ReLU.  x is cast to the weight dtype in-VMEM (no-op for f32);
    # the MXU accumulates in f32, bias add / ReLU ride the VALU.
    x = x_ref[...].astype(w1_ref.dtype)
    h = jnp.dot(x, w1_ref[...], preferred_element_type=jnp.float32)
    h = jnp.maximum(h + b1_ref[...], 0.0)            # b1 is (1, Hp), broadcasts
    # fc2 on the padded (Hp, Np) weight tile (lane-dense matmul), then store
    # only the real out_dim columns -- narrow masked store is <5% of the x read.
    y = jnp.dot(h.astype(w2_ref.dtype), w2_ref[...],
                preferred_element_type=jnp.float32)
    o_ref[...] = (y[:, :out_dim] + b2_ref[...]).astype(o_ref.dtype)


@functools.partial(jax.jit, static_argnames=("block_b", "use_bf16"))
def net_forward(x, w1, b1, w2, b2, *, block_b: int = 8192, use_bf16: bool = False):
    """Forward pass of Net.

    Args:
      x:  [B, input_shape]   float32
      w1: [input_shape, 50]  float32 (already transposed from PyTorch [50, in])
      b1: [50]               float32
      w2: [50, output_shape] float32
      b2: [output_shape]     float32
      block_b: max batch tile size (rows per grid step).
      use_bf16: cast w1 / w2 to bf16 for the MXU (x cast in-kernel, f32 accum).
    Returns:
      [B, output_shape] float32 logits.
    """
    B, in_dim = x.shape
    hidden = w1.shape[1]
    out_dim = w2.shape[1]

    # --- lane-dense padding of the hidden / matmul dims (exact: pads are 0) --
    Hp = _round_up(max(hidden, 128), 128)    # hidden 50 -> 128
    Np = _round_up(max(out_dim, 128), 128)   # fc2 matmul width 4 -> 128

    w_dtype = jnp.bfloat16 if use_bf16 else jnp.float32
    w1_p = jnp.pad(w1, ((0, 0), (0, Hp - hidden))).astype(w_dtype)
    b1_p = jnp.pad(b1, ((0, Hp - hidden),)).reshape(1, Hp)            # f32
    w2_p = jnp.pad(w2, ((0, Hp - hidden), (0, Np - out_dim))).astype(w_dtype)
    b2_r = b2.reshape(1, out_dim)                                     # f32

    # --- VMEM-aware batch tile ----------------------------------------------
    # Double-buffered streaming tiles: x (f32, in_dim cols) + out (f32, out_dim
    # cols).  Budget kept well under v5e's 16 MiB scoped default / v7x's 64 MiB.
    stream_budget = 12 * 1024 * 1024
    per_row_bytes = 2 * (in_dim * 4 + out_dim * 4)
    tb_vmem_cap = max(8, (stream_budget // per_row_bytes) // 8 * 8)
    tb = min(block_b, tb_vmem_cap)
    # >=2 grid tiles whenever B > 8 so both v7x TensorCores get work.
    tb = min(tb, _round_up(pl.cdiv(B, 2), 8))
    tb = max(8, (tb // 8) * 8)
    num_tiles = pl.cdiv(B, tb)               # ragged last block masked by Pallas

    w_bytes = 2 if use_bf16 else 4
    cost = pl.CostEstimate(
        flops=2 * B * (in_dim * hidden + hidden * out_dim),
        transcendentals=0,
        bytes_accessed=B * in_dim * 4
        + (in_dim * Hp + Hp * Np) * w_bytes
        + (Hp + out_dim) * 4
        + B * out_dim * 4,
    )

    kernel = functools.partial(_mlp_kernel, out_dim=out_dim)

    out = pl.pallas_call(
        kernel,
        out_shape=jax.ShapeDtypeStruct((B, out_dim), jnp.float32),
        grid=(num_tiles,),
        in_specs=[
            pl.BlockSpec((tb, in_dim), lambda i: (i, 0)),   # x tiles stream
            pl.BlockSpec((in_dim, Hp), lambda i: (0, 0)),   # weights VMEM-resident
            pl.BlockSpec((1, Hp), lambda i: (0, 0)),
            pl.BlockSpec((Hp, Np), lambda i: (0, 0)),
            pl.BlockSpec((1, out_dim), lambda i: (0, 0)),
        ],
        out_specs=pl.BlockSpec((tb, out_dim), lambda i: (i, 0)),  # un-padded out
        compiler_params=pltpu.CompilerParams(
            dimension_semantics=("parallel",),              # megacore / 2x TC on v7x
        ),
        cost_estimate=cost,
    )(x, w1_p, b1_p, w2_p, b2_r)

    return out


if __name__ == "__main__":
    # Synthetic sizes consistent with the module:
    #   input_shape = X.shape[1]        -> pick 32
    #   hidden      = 50 (fixed by fc1)
    #   output_shape = len(set(Y))      -> pick 4 classes
    batch = 8
    input_shape = 32
    hidden = 50
    output_shape = 4

    key = jax.random.PRNGKey(0)
    kx, kw1, kb1, kw2, kb2 = jax.random.split(key, 5)

    x = jax.random.normal(kx, (batch, input_shape), dtype=jnp.float32)

    # Deterministic parameter init (uniform, roughly matching nn.Linear scale).
    lim1 = 1.0 / jnp.sqrt(jnp.float32(input_shape))
    lim2 = 1.0 / jnp.sqrt(jnp.float32(hidden))
    # Stored directly as [in, out] (PyTorch stores [out, in]; transpose is glue).
    w1 = jax.random.uniform(kw1, (input_shape, hidden), jnp.float32, -lim1, lim1)
    b1 = jax.random.uniform(kb1, (hidden,), jnp.float32, -lim1, lim1)
    w2 = jax.random.uniform(kw2, (hidden, output_shape), jnp.float32, -lim2, lim2)
    b2 = jax.random.uniform(kb2, (output_shape,), jnp.float32, -lim2, lim2)

    out = net_forward(x, w1, b1, w2, b2)
    jax.block_until_ready(out)

    # Reference check in plain JAX (same math as the PyTorch forward).
    ref = jnp.maximum(x @ w1 + b1, 0.0) @ w2 + b2
    assert out.shape == (batch, output_shape)
    assert jnp.allclose(out, ref, atol=1e-5, rtol=1e-5)

    # Exercise the multi-tile + ragged-last-block path against the reference.
    big_B = 300
    xb = jax.random.normal(kx, (big_B, input_shape), dtype=jnp.float32)
    out_big = net_forward(xb, w1, b1, w2, b2, block_b=128)
    jax.block_until_ready(out_big)
    ref_big = jnp.maximum(xb @ w1 + b1, 0.0) @ w2 + b2
    assert out_big.shape == (big_B, output_shape)
    assert jnp.allclose(out_big, ref_big, atol=1e-5, rtol=1e-5)

    print("KERNEL_OK")
</pallas_src>

<mosaic_0001>
module attributes {stable_mosaic.version = 11 : i64} {
  func.func @_mlp_kernel(%arg0: i32, %arg1: memref<8x32xf32, #tpu.memory_space<vmem>>, %arg2: memref<32x128xf32, #tpu.memory_space<vmem>>, %arg3: memref<1x128xf32, #tpu.memory_space<vmem>>, %arg4: memref<128x128xf32, #tpu.memory_space<vmem>>, %arg5: memref<1x4xf32, #tpu.memory_space<vmem>>, %arg6: memref<8x4xf32, #tpu.memory_space<vmem>>) attributes {dimension_semantics = [#tpu.dimension_semantics<parallel>], iteration_bounds = array<i64: 1>, scalar_prefetch = 0 : i64, scratch_operands = 0 : i64, tpu.core_type = #tpu.core_type<tc>, window_params = [{transform_indices = @transform_0, window_bounds = array<i64: 8, 32>}, {pipeline_mode = #tpu.pipeline_mode<synchronous>, transform_indices = @transform_1, window_bounds = array<i64: 32, 128>}, {pipeline_mode = #tpu.pipeline_mode<synchronous>, transform_indices = @transform_2, window_bounds = array<i64: 1, 128>}, {pipeline_mode = #tpu.pipeline_mode<synchronous>, transform_indices = @transform_3, window_bounds = array<i64: 128, 128>}, {pipeline_mode = #tpu.pipeline_mode<synchronous>, transform_indices = @transform_4, window_bounds = array<i64: 1, 4>}, {transform_indices = @transform_5, window_bounds = array<i64: 8, 4>}]} {
    %c0 = arith.constant 0 : index
    %c0_0 = arith.constant 0 : index
    %0 = vector.load %arg1[%c0, %c0_0] : memref<8x32xf32, #tpu.memory_space<vmem>>, vector<8x32xf32>
    %c0_1 = arith.constant 0 : index
    %c0_2 = arith.constant 0 : index
    %1 = vector.load %arg2[%c0_1, %c0_2] : memref<32x128xf32, #tpu.memory_space<vmem>>, vector<32x128xf32>
    %cst = arith.constant dense<0.000000e+00> : vector<8x128xf32>
    %2 = tpu.matmul %0, %1, %cst {dimension_numbers = #tpu.dot_dimension_numbers<[1], [0], [0], [1], [0, 0, 1, 1], [], []>} : vector<8x32xf32>, vector<32x128xf32>, vector<8x128xf32> -> vector<8x128xf32>
    %c0_3 = arith.constant 0 : index
    %c0_4 = arith.constant 0 : index
    %3 = vector.load %arg3[%c0_3, %c0_4] : memref<1x128xf32, #tpu.memory_space<vmem>>, vector<1x128xf32>
    %4 = vector.broadcast %3 : vector<1x128xf32> to vector<8x128xf32>
    %5 = arith.addf %2, %4 : vector<8x128xf32>
    %cst_5 = arith.constant 0.000000e+00 : f32
    %6 = vector.broadcast %cst_5 : f32 to vector<8x128xf32>
    %7 = arith.maximumf %5, %6 : vector<8x128xf32>
    %c0_6 = arith.constant 0 : index
    %c0_7 = arith.constant 0 : index
    %8 = vector.load %arg4[%c0_6, %c0_7] : memref<128x128xf32, #tpu.memory_space<vmem>>, vector<128x128xf32>
    %cst_8 = arith.constant dense<0.000000e+00> : vector<8x128xf32>
    %9 = tpu.matmul %7, %8, %cst_8 {dimension_numbers = #tpu.dot_dimension_numbers<[1], [0], [0], [1], [0, 0, 1, 1], [], []>} : vector<8x128xf32>, vector<128x128xf32>, vector<8x128xf32> -> vector<8x128xf32>
    %10 = vector.extract_strided_slice %9 {offsets = [0, 0], sizes = [8, 4], strides = [1, 1]} : vector<8x128xf32> to vector<8x4xf32>
    %c0_9 = arith.constant 0 : index
    %c0_10 = arith.constant 0 : index
    %11 = vector.load %arg5[%c0_9, %c0_10] : memref<1x4xf32, #tpu.memory_space<vmem>>, vector<1x4xf32>
    %12 = vector.broadcast %11 : vector<1x4xf32> to vector<8x4xf32>
    %13 = arith.addf %10, %12 : vector<8x4xf32>
    %c0_11 = arith.constant 0 : index
    %c0_12 = arith.constant 0 : index
    %14 = vector.load %arg6[%c0_11, %c0_12] : memref<8x4xf32, #tpu.memory_space<vmem>>, vector<8x4xf32>
    tpu.vector_store %arg6[%c0_11, %c0_12], %13 {strides = array<i32>} : memref<8x4xf32, #tpu.memory_space<vmem>>, vector<8x4xf32>,
    return
  }
  func.func @transform_0(%arg0: i32) -> (i32, i32) {
    %c0_i32 = arith.constant 0 : i32
    %c0_i32_0 = arith.constant 0 : i32
    return %arg0, %c0_i32 : i32, i32
  }
  func.func @transform_1(%arg0: i32) -> (i32, i32) {
    %c0_i32 = arith.constant 0 : i32
    %c0_i32_0 = arith.constant 0 : i32
    %c0_i32_1 = arith.constant 0 : i32
    return %c0_i32, %c0_i32_0 : i32, i32
  }
  func.func @transform_2(%arg0: i32) -> (i32, i32) {
    %c0_i32 = arith.constant 0 : i32
    %c0_i32_0 = arith.constant 0 : i32
    %c0_i32_1 = arith.constant 0 : i32
    return %c0_i32, %c0_i32_0 : i32, i32
  }
  func.func @transform_3(%arg0: i32) -> (i32, i32) {
    %c0_i32 = arith.constant 0 : i32
    %c0_i32_0 = arith.constant 0 : i32
    %c0_i32_1 = arith.constant 0 : i32
    return %c0_i32, %c0_i32_0 : i32, i32
  }
  func.func @transform_4(%arg0: i32) -> (i32, i32) {
    %c0_i32 = arith.constant 0 : i32
    %c0_i32_0 = arith.constant 0 : i32
    %c0_i32_1 = arith.constant 0 : i32
    return %c0_i32, %c0_i32_0 : i32, i32
  }
  func.func @transform_5(%arg0: i32) -> (i32, i32) {
    %c0_i32 = arith.constant 0 : i32
    %c0_i32_0 = arith.constant 0 : i32
    return %arg0, %c0_i32 : i32, i32
  }
}

</mosaic_0001>

<llo_original>
// kernel: net_forward.1
$region0: #{net_forward.1}
  #allocation0 [shape = 'u32[]', space=smem, size = 0x4, offset = 0x4, fixed_abs, tag = 'smem constant byte address 0x4 - core index']
  #allocation1 [shape = 'u32[144,128]{1,0:T(1,128)}', space=vmem, size = 0x12000, scoped, tag = 'internal scratch']
  %s0 = inlined_call_operand.vmem [shape: f32[8,32], index: 0, kind: input, shape index: {}]
  %s1 = inlined_call_operand.vmem [shape: f32[32,128], index: 1, kind: input, shape index: {}]
  %s2 = inlined_call_operand.vmem [shape: f32[1,128], index: 2, kind: input, shape index: {}]
  %s3 = inlined_call_operand.vmem [shape: f32[128,128], index: 3, kind: input, shape index: {}]
  %s4 = inlined_call_operand.vmem [shape: f32[1,4], index: 4, kind: input, shape index: {}]
  %s5 = inlined_call_operand.vmem [shape: f32[8,4], index: 5, kind: output, shape index: {}]
  %s6 = sld [smem:[#allocation0]]
  $region30: #{net_forward.1} parent=0
    _
  %s8 = ssub.s32 1, %s6
  %s9 = scalar_select 0, %s8, %s6
  // Predicated region
  $region2: #{net_forward.1} parent=0 // pred_check
    _
  $region3: #{net_forward.1} parent=0 // pred_check_branch
    %11 = sbr.rel (0) target = $region5
  $region4: #{net_forward.1} parent=0 // pred_region
    _
  $region5: #{net_forward.1} parent=0 // pred_fallthru
    _
  // Predicated region
  $region6: #{net_forward.1} parent=0 // pred_check
    _
  $region7: #{net_forward.1} parent=0 // pred_check_branch
    %13 = sbr.rel (0) target = $region9
  $region8: #{net_forward.1} parent=0 // pred_region
    _
  $region9: #{net_forward.1} parent=0 // pred_fallthru
    _
  // Predicated region
  $region10: #{net_forward.1} parent=0 // pred_check
    _
  $region11: #{net_forward.1} parent=0 // pred_check_branch
    %15 = sbr.rel (0) target = $region13
  $region12: #{net_forward.1} parent=0 // pred_region
    _
  $region13: #{net_forward.1} parent=0 // pred_fallthru
    _
  // Predicated region
  $region14: #{net_forward.1} parent=0 // pred_check
    _
  $region15: #{net_forward.1} parent=0 // pred_check_branch
    %17 = sbr.rel (0) target = $region17
  $region16: #{net_forward.1} parent=0 // pred_region
    _
  $region17: #{net_forward.1} parent=0 // pred_fallthru
    _
  // Predicated region
  $region18: #{net_forward.1} parent=0 // pred_check
    _
  $region19: #{net_forward.1} parent=0 // pred_check_branch
    %19 = sbr.rel (0) target = $region21
  $region20: #{net_forward.1} parent=0 // pred_region
    _
  $region21: #{net_forward.1} parent=0 // pred_fallthru
    _
  %v20 = vld [vmem:[%s0] sm:$0xff]
  %v21 = vld [vmem:[%s1] sm:$0xff]
  %v22 = vld [vmem:[%s1 + $0x8] sm:$0xff]
  %v23 = vld [vmem:[%s1 + $0x10] sm:$0xff]
  %v24 = vld [vmem:[%s1 + $0x18] sm:$0xff]
  %v25 = vld [vmem:[%s2] sm:$0x1]
  %v27 = vlaneseq
  %v28 = vshrl.u32 %v27, 7
  %v29 = vsub.s32 0, %v28
  %v30 = vrot.slane %v25, %v29
  %vm32 = vcmask 261120
  %v34 = vsel %vm32, %v20, 0
  %36 = vmatprep.subr.mxu0 0.0
  %37 = vmatpush1.msra.mxu0 %v21
  %38 = vmatprep.subr.mxu0 0.0
  %39 = vmatpush1.msra.mxu0 %v22
  %40 = vmatprep.subr.mxu0 0.0
  %41 = vmatpush1.msra.mxu0 %v23
  %42 = vmatprep.subr.mxu0 0.0
  %43 = vmatpush1.msra.mxu0 %v24
  %44 = vmatprep.subr.mxu0 0.0
  %45 = vmatpush1.msra.mxu0 0.0
  %46 = vmatprep.subr.mxu0 0.0
  %47 = vmatpush1.msra.mxu0 0.0
  %48 = vmatprep.subr.mxu0 0.0
  %49 = vmatpush1.msra.mxu0 0.0
  %50 = vmatprep.subr.mxu0 0.0
  %51 = vmatpush1.msra.mxu0 0.0
  %52 = vmatprep.subr.mxu0 0.0
  %53 = vmatpush1.msra.mxu0 0.0
  %54 = vmatprep.subr.mxu0 0.0
  %55 = vmatpush1.msra.mxu0 0.0
  %56 = vmatprep.subr.mxu0 0.0
  %57 = vmatpush1.msra.mxu0 0.0
  %58 = vmatprep.subr.mxu0 0.0
  %59 = vmatpush1.msra.mxu0 0.0
  %60 = vmatprep.subr.mxu0 0.0
  %61 = vmatpush1.msra.mxu0 0.0
  %62 = vmatprep.subr.mxu0 0.0
  %63 = vmatpush1.msra.mxu0 0.0
  %64 = vmatprep.subr.mxu0 0.0
  %65 = vmatpush1.msra.mxu0 0.0
  %66 = vmatprep.subr.mxu0 0.0
  %67 = vmatpush1.msra.mxu0 0.0
  %68 = vmatprep.subr.mxu0 0.0
  %69 = vmatpush1.msra.mxu0 0.0
  %70 = vmatprep.subr.mxu0 0.0
  %71 = vmatpush1.msra.mxu0 0.0
  %72 = vmatprep.subr.mxu0 0.0
  %73 = vmatpush1.msra.mxu0 0.0
  %74 = vmatprep.subr.mxu0 0.0
  %75 = vmatpush1.msra.mxu0 0.0
  %76 = vmatprep.subr.mxu0 0.0
  %77 = vmatpush1.msra.mxu0 0.0
  %78 = vmatprep.subr.mxu0 0.0
  %79 = vmatpush1.msra.mxu0 0.0
  %80 = vmatprep.subr.mxu0 0.0
  %81 = vmatpush1.msra.mxu0 0.0
  %82 = vmatprep.subr.mxu0 0.0
  %83 = vmatpush1.msra.mxu0 0.0
  %84 = vmatprep.subr.mxu0 0.0
  %85 = vmatpush1.msra.mxu0 0.0
  %86 = vmatprep.subr.mxu0 0.0
  %87 = vmatpush1.msra.mxu0 0.0
  %88 = vmatprep.subr.mxu0 0.0
  %89 = vmatpush1.msra.mxu0 0.0
  %90 = vmatprep.subr.mxu0 0.0
  %91 = vmatpush1.msra.mxu0 0.0
  %92 = vmatprep.subr.mxu0 0.0
  %93 = vmatpush1.msra.mxu0 0.0
  %94 = vmatprep.subr.mxu0 0.0
  %95 = vmatpush1.msra.mxu0 0.0
  %96 = vmatprep.subr.mxu0 0.0
  %97 = vmatpush1.msra.mxu0 0.0
  %98 = vmatprep.subr.mxu0 0.0
  %99 = vmatpush1.msra.mxu0 0.0
  %100 = vmatprep.mubr.f32.mxu0 0.0
  %101 = vmatmul.mubr.f32.gmra.mrb[0].mxu0 %v34
  %v102 = vpop.f32.mrb[0].mxu0
  %v103 = vadd.f32 %v30, %v102
  %v104 = vpop.f32.mrb[0].mxu0
  %105 = vdwg.mxu0
  %v106 = vmax.f32 %v103, 0.0
  %v107 = vld [vmem:[%s3] sm:$0xff]
  %v108 = vld [vmem:[%s3 + $0x8] sm:$0xff]
  %v109 = vld [vmem:[%s3 + $0x10] sm:$0xff]
  %v110 = vld [vmem:[%s3 + $0x18] sm:$0xff]
  %v111 = vld [vmem:[%s3 + $0x20] sm:$0xff]
  %v112 = vld [vmem:[%s3 + $0x28] sm:$0xff]
  %v113 = vld [vmem:[%s3 + $0x30] sm:$0xff]
  %v114 = vld [vmem:[%s3 + $0x38] sm:$0xff]
  %v115 = vld [vmem:[%s3 + $0x40] sm:$0xff]
  %v116 = vld [vmem:[%s3 + $0x48] sm:$0xff]
  %v117 = vld [vmem:[%s3 + $0x50] sm:$0xff]
  %v118 = vld [vmem:[%s3 + $0x58] sm:$0xff]
  %v119 = vld [vmem:[%s3 + $0x60] sm:$0xff]
  %v120 = vld [vmem:[%s3 + $0x68] sm:$0xff]
  %v121 = vld [vmem:[%s3 + $0x70] sm:$0xff]
  %v122 = vld [vmem:[%s3 + $0x78] sm:$0xff]
  %123 = vmatprep.subr.mxu0 0.0
  %124 = vmatpush1.msra.mxu0 %v107
  %125 = vmatprep.subr.mxu0 0.0
  %126 = vmatpush1.msra.mxu0 %v108
  %127 = vmatprep.subr.mxu0 0.0
  %128 = vmatpush1.msra.mxu0 %v109
  %129 = vmatprep.subr.mxu0 0.0
  %130 = vmatpush1.msra.mxu0 %v110
  %131 = vmatprep.subr.mxu0 0.0
  %132 = vmatpush1.msra.mxu0 %v111
  %133 = vmatprep.subr.mxu0 0.0
  %134 = vmatpush1.msra.mxu0 %v112
  %135 = vmatprep.subr.mxu0 0.0
  %136 = vmatpush1.msra.mxu0 %v113
  %137 = vmatprep.subr.mxu0 0.0
  %138 = vmatpush1.msra.mxu0 %v114
  %139 = vmatprep.subr.mxu0 0.0
  %140 = vmatpush1.msra.mxu0 %v115
  %141 = vmatprep.subr.mxu0 0.0
  %142 = vmatpush1.msra.mxu0 %v116
  %143 = vmatprep.subr.mxu0 0.0
  %144 = vmatpush1.msra.mxu0 %v117
  %145 = vmatprep.subr.mxu0 0.0
  %146 = vmatpush1.msra.mxu0 %v118
  %147 = vmatprep.subr.mxu0 0.0
  %148 = vmatpush1.msra.mxu0 %v119
  %149 = vmatprep.subr.mxu0 0.0
  %150 = vmatpush1.msra.mxu0 %v120
  %151 = vmatprep.subr.mxu0 0.0
  %152 = vmatpush1.msra.mxu0 %v121
  %153 = vmatprep.subr.mxu0 0.0
  %154 = vmatpush1.msra.mxu0 %v122
  %155 = vmatprep.subr.mxu0 0.0
  %156 = vmatpush1.msra.mxu0 0.0
  %157 = vmatprep.subr.mxu0 0.0
  %158 = vmatpush1.msra.mxu0 0.0
  %159 = vmatprep.subr.mxu0 0.0
  %160 = vmatpush1.msra.mxu0 0.0
  %161 = vmatprep.subr.mxu0 0.0
  %162 = vmatpush1.msra.mxu0 0.0
  %163 = vmatprep.subr.mxu0 0.0
  %164 = vmatpush1.msra.mxu0 0.0
  %165 = vmatprep.subr.mxu0 0.0
  %166 = vmatpush1.msra.mxu0 0.0
  %167 = vmatprep.subr.mxu0 0.0
  %168 = vmatpush1.msra.mxu0 0.0
  %169 = vmatprep.subr.mxu0 0.0
  %170 = vmatpush1.msra.mxu0 0.0
  %171 = vmatprep.subr.mxu0 0.0
  %172 = vmatpush1.msra.mxu0 0.0
  %173 = vmatprep.subr.mxu0 0.0
  %174 = vmatpush1.msra.mxu0 0.0
  %175 = vmatprep.subr.mxu0 0.0
  %176 = vmatpush1.msra.mxu0 0.0
  %177 = vmatprep.subr.mxu0 0.0
  %178 = vmatpush1.msra.mxu0 0.0
  %179 = vmatprep.subr.mxu0 0.0
  %180 = vmatpush1.msra.mxu0 0.0
  %181 = vmatprep.subr.mxu0 0.0
  %182 = vmatpush1.msra.mxu0 0.0
  %183 = vmatprep.subr.mxu0 0.0
  %184 = vmatpush1.msra.mxu0 0.0
  %185 = vmatprep.subr.mxu0 0.0
  %186 = vmatpush1.msra.mxu0 0.0
  %187 = vmatprep.mubr.f32.mxu0 0.0
  %188 = vmatmul.mubr.f32.gmra.mrb[0].mxu0 %v106
  %v189 = vpop.f32.mrb[0].mxu0
  %v190 = vadd.f32 0.0, %v189
  %v191 = vpop.f32.mrb[0].mxu0
  %192 = vdwg.mxu0
  %v193 = vld [vmem:[%s4] sm:$0x1]
  %v195 = vlaneseq
  %v196 = vshrl.u32 %v195, 7
  %v197 = vsub.s32 0, %v196
  %v198 = vrot.slane %v193, %v197
  %v200 = vadd.f32 %v190, %v198
  %vm201 = vcmask 31744
  %202 = vst.msk [vmem:[%s5] sm:$0xff] %vm201, %v200
  // Predicated region
  $region22: #{net_forward.1} parent=0 // pred_check
    _
  $region23: #{net_forward.1} parent=0 // pred_check_branch
    %204 = sbr.rel (0) target = $region25
  $region24: #{net_forward.1} parent=0 // pred_region
    _
  $region25: #{net_forward.1} parent=0 // pred_fallthru
    _
  // Predicated region
  $region26: #{net_forward.1} parent=0 // pred_check
    _
  $region27: #{net_forward.1} parent=0 // pred_check_branch
    %206 = sbr.rel (0) target = $region29
  $region28: #{net_forward.1} parent=0 // pred_region
    _
  $region29: #{net_forward.1} parent=0 // pred_fallthru
    _

</llo_original>
